<compile_context>
chip_gen: v6e
topology: v6e:2x2x1
jax: 0.10.0
libtpu: 0.0.40
codegen_flags: <defaults>
</compile_context>

<pallas_src>
import jax
import jax.numpy as jnp
from jax.experimental import pallas as pl
from jax.experimental.pallas import tpu as pltpu

IN_FEATURES = 16
HIDDEN = 16
OUT_FEATURES = 10


def _mlp_kernel(x_ref, w1_ref, b1_ref, w2_ref, b2_ref, o_ref):
    # Layer 1: [tile_b, 16] @ [16, 16] -> [tile_b, 16]  (MXU pads K/N internally).
    h = jnp.dot(x_ref[...], w1_ref[...], preferred_element_type=jnp.float32)
    h = h + b1_ref[...]
    # sigmoid(x) == 0.5*(tanh(x/2)+1): one EUP op, avoids a precise VPU divide.
    h = 0.5 * (jnp.tanh(0.5 * h) + 1.0)
    # Layer 2: [tile_b, 16] @ [16, 10] -> [tile_b, 10].
    out = jnp.dot(h.astype(w2_ref.dtype), w2_ref[...],
                  preferred_element_type=jnp.float32)
    out = out + b2_ref[...]
    o_ref[...] = out.astype(o_ref.dtype)   # narrow (10-lane) store; block spans full rows


def classification_network_forward(x, w1, b1, w2, b2, *, tile_b=4096):
    """x: [B, 16]; w1: [16,16]; b1: [1,16]; w2: [16,10]; b2: [1,10] (weights [in,out]).
    Returns [B, 10]."""
    B, F = x.shape
    assert F == IN_FEATURES
    dtype = x.dtype

    w1 = w1.astype(dtype)
    b1 = b1.reshape(1, HIDDEN).astype(dtype)
    w2 = w2.astype(dtype)
    b2 = b2.reshape(1, OUT_FEATURES).astype(dtype)

    # tile_b: multiple of 8 (sublane rule), capped for VMEM, no larger than the
    # (8-rounded) batch.  Last grid block may be ragged; Pallas masks it.
    tile_b = max(8, (int(tile_b) // 8) * 8)
    tile_b = min(tile_b, 8192, pl.cdiv(B, 8) * 8)
    grid = (pl.cdiv(B, tile_b),)

    out = pl.pallas_call(
        _mlp_kernel,
        out_shape=jax.ShapeDtypeStruct((B, OUT_FEATURES), dtype),
        grid_spec=pltpu.PrefetchScalarGridSpec(
            num_scalar_prefetch=0,
            grid=grid,
            in_specs=[
                pl.BlockSpec((tile_b, IN_FEATURES), lambda i: (i, 0)),   # x tile
                pl.BlockSpec((IN_FEATURES, HIDDEN), lambda i: (0, 0)),   # w1 resident
                pl.BlockSpec((1, HIDDEN), lambda i: (0, 0)),             # b1 resident
                pl.BlockSpec((HIDDEN, OUT_FEATURES), lambda i: (0, 0)),  # w2 resident
                pl.BlockSpec((1, OUT_FEATURES), lambda i: (0, 0)),       # b2 resident
            ],
            out_specs=pl.BlockSpec((tile_b, OUT_FEATURES), lambda i: (i, 0)),
        ),
        compiler_params=pltpu.CompilerParams(
            dimension_semantics=("parallel",),      # shard batch tiles across TCs
            vmem_limit_bytes=28 * 1024 * 1024,      # fits v7x (64 MiB physical)
        ),
    )(x, w1, b1, w2, b2)
    return out


def init_params(key):
    """Deterministic init matching nn.Linear's default scheme
    (uniform in [-1/sqrt(fan_in), 1/sqrt(fan_in)]); weights stored [in, out]."""
    k1, k2, k3, k4 = jax.random.split(key, 4)
    bound = 1.0 / jnp.sqrt(16.0)
    w1 = jax.random.uniform(k1, (IN_FEATURES, HIDDEN), jnp.float32, -bound, bound)
    b1 = jax.random.uniform(k2, (1, HIDDEN), jnp.float32, -bound, bound)
    w2 = jax.random.uniform(k3, (HIDDEN, OUT_FEATURES), jnp.float32, -bound, bound)
    b2 = jax.random.uniform(k4, (1, OUT_FEATURES), jnp.float32, -bound, bound)
    return w1, b1, w2, b2


def reference_forward(x, w1, b1, w2, b2):
    h = jax.nn.sigmoid(x @ w1 + b1)
    return h @ w2 + b2


if __name__ == "__main__":
    key = jax.random.PRNGKey(0)
    kx, kp, kx2 = jax.random.split(key, 3)
    w1, b1, w2, b2 = init_params(kp)

    # Small-batch sanity check (single grid step).
    B = 8
    x = jax.random.normal(kx, (B, IN_FEATURES), jnp.float32)
    out = jax.block_until_ready(classification_network_forward(x, w1, b1, w2, b2))
    ref = reference_forward(x, w1, b1, w2, b2)
    assert out.shape == (B, OUT_FEATURES)
    assert jnp.allclose(out, ref, atol=1e-5, rtol=1e-5), "mismatch vs reference (B=8)"

    # Multi-tile + ragged last block (exercises grid and masked partial writeback).
    B2 = 200
    x2 = jax.random.normal(kx2, (B2, IN_FEATURES), jnp.float32)
    out2 = jax.block_until_ready(
        classification_network_forward(x2, w1, b1, w2, b2, tile_b=64))
    ref2 = reference_forward(x2, w1, b1, w2, b2)
    assert out2.shape == (B2, OUT_FEATURES)
    assert jnp.allclose(out2, ref2, atol=1e-5, rtol=1e-5), "mismatch vs reference (B=200)"

    print("KERNEL_OK")
</pallas_src>

<mosaic_0001>
module attributes {stable_mosaic.version = 11 : i64} {
  func.func @_mlp_kernel(%arg0: i32, %arg1: memref<8x16xf32, #tpu.memory_space<vmem>>, %arg2: memref<16x16xf32, #tpu.memory_space<vmem>>, %arg3: memref<1x16xf32, #tpu.memory_space<vmem>>, %arg4: memref<16x10xf32, #tpu.memory_space<vmem>>, %arg5: memref<1x10xf32, #tpu.memory_space<vmem>>, %arg6: memref<8x10xf32, #tpu.memory_space<vmem>>) attributes {dimension_semantics = [#tpu.dimension_semantics<parallel>], iteration_bounds = array<i64: 1>, scalar_prefetch = 0 : i64, scratch_operands = 0 : i64, tpu.core_type = #tpu.core_type<tc>, window_params = [{transform_indices = @transform_0, window_bounds = array<i64: 8, 16>}, {pipeline_mode = #tpu.pipeline_mode<synchronous>, transform_indices = @transform_1, window_bounds = array<i64: 16, 16>}, {pipeline_mode = #tpu.pipeline_mode<synchronous>, transform_indices = @transform_2, window_bounds = array<i64: 1, 16>}, {pipeline_mode = #tpu.pipeline_mode<synchronous>, transform_indices = @transform_3, window_bounds = array<i64: 16, 10>}, {pipeline_mode = #tpu.pipeline_mode<synchronous>, transform_indices = @transform_4, window_bounds = array<i64: 1, 10>}, {transform_indices = @transform_5, window_bounds = array<i64: 8, 10>}]} {
    %c0 = arith.constant 0 : index
    %c0_0 = arith.constant 0 : index
    %0 = vector.load %arg1[%c0, %c0_0] : memref<8x16xf32, #tpu.memory_space<vmem>>, vector<8x16xf32>
    %c0_1 = arith.constant 0 : index
    %c0_2 = arith.constant 0 : index
    %1 = vector.load %arg2[%c0_1, %c0_2] : memref<16x16xf32, #tpu.memory_space<vmem>>, vector<16x16xf32>
    %cst = arith.constant dense<0.000000e+00> : vector<8x16xf32>
    %2 = tpu.matmul %0, %1, %cst {dimension_numbers = #tpu.dot_dimension_numbers<[1], [0], [0], [1], [0, 0, 1, 1], [], []>} : vector<8x16xf32>, vector<16x16xf32>, vector<8x16xf32> -> vector<8x16xf32>
    %c0_3 = arith.constant 0 : index
    %c0_4 = arith.constant 0 : index
    %3 = vector.load %arg3[%c0_3, %c0_4] : memref<1x16xf32, #tpu.memory_space<vmem>>, vector<1x16xf32>
    %4 = vector.broadcast %3 : vector<1x16xf32> to vector<8x16xf32>
    %5 = arith.addf %2, %4 : vector<8x16xf32>
    %cst_5 = arith.constant 5.000000e-01 : f32
    %6 = vector.broadcast %cst_5 : f32 to vector<8x16xf32>
    %7 = arith.mulf %6, %5 : vector<8x16xf32>
    %8 = math.tanh %7 : vector<8x16xf32>
    %cst_6 = arith.constant 1.000000e+00 : f32
    %9 = vector.broadcast %cst_6 : f32 to vector<8x16xf32>
    %10 = arith.addf %8, %9 : vector<8x16xf32>
    %cst_7 = arith.constant 5.000000e-01 : f32
    %11 = vector.broadcast %cst_7 : f32 to vector<8x16xf32>
    %12 = arith.mulf %11, %10 : vector<8x16xf32>
    %c0_8 = arith.constant 0 : index
    %c0_9 = arith.constant 0 : index
    %13 = vector.load %arg4[%c0_8, %c0_9] : memref<16x10xf32, #tpu.memory_space<vmem>>, vector<16x10xf32>
    %cst_10 = arith.constant dense<0.000000e+00> : vector<8x10xf32>
    %14 = tpu.matmul %12, %13, %cst_10 {dimension_numbers = #tpu.dot_dimension_numbers<[1], [0], [0], [1], [0, 0, 1, 1], [], []>} : vector<8x16xf32>, vector<16x10xf32>, vector<8x10xf32> -> vector<8x10xf32>
    %c0_11 = arith.constant 0 : index
    %c0_12 = arith.constant 0 : index
    %15 = vector.load %arg5[%c0_11, %c0_12] : memref<1x10xf32, #tpu.memory_space<vmem>>, vector<1x10xf32>
    %16 = vector.broadcast %15 : vector<1x10xf32> to vector<8x10xf32>
    %17 = arith.addf %14, %16 : vector<8x10xf32>
    %c0_13 = arith.constant 0 : index
    %c0_14 = arith.constant 0 : index
    %18 = vector.load %arg6[%c0_13, %c0_14] : memref<8x10xf32, #tpu.memory_space<vmem>>, vector<8x10xf32>
    tpu.vector_store %arg6[%c0_13, %c0_14], %17 {strides = array<i32>} : memref<8x10xf32, #tpu.memory_space<vmem>>, vector<8x10xf32>,
    return
  }
  func.func @transform_0(%arg0: i32) -> (i32, i32) {
    %c0_i32 = arith.constant 0 : i32
    %c0_i32_0 = arith.constant 0 : i32
    return %arg0, %c0_i32 : i32, i32
  }
  func.func @transform_1(%arg0: i32) -> (i32, i32) {
    %c0_i32 = arith.constant 0 : i32
    %c0_i32_0 = arith.constant 0 : i32
    %c0_i32_1 = arith.constant 0 : i32
    return %c0_i32, %c0_i32_0 : i32, i32
  }
  func.func @transform_2(%arg0: i32) -> (i32, i32) {
    %c0_i32 = arith.constant 0 : i32
    %c0_i32_0 = arith.constant 0 : i32
    %c0_i32_1 = arith.constant 0 : i32
    return %c0_i32, %c0_i32_0 : i32, i32
  }
  func.func @transform_3(%arg0: i32) -> (i32, i32) {
    %c0_i32 = arith.constant 0 : i32
    %c0_i32_0 = arith.constant 0 : i32
    %c0_i32_1 = arith.constant 0 : i32
    return %c0_i32, %c0_i32_0 : i32, i32
  }
  func.func @transform_4(%arg0: i32) -> (i32, i32) {
    %c0_i32 = arith.constant 0 : i32
    %c0_i32_0 = arith.constant 0 : i32
    %c0_i32_1 = arith.constant 0 : i32
    return %c0_i32, %c0_i32_0 : i32, i32
  }
  func.func @transform_5(%arg0: i32) -> (i32, i32) {
    %c0_i32 = arith.constant 0 : i32
    %c0_i32_0 = arith.constant 0 : i32
    return %arg0, %c0_i32 : i32, i32
  }
}

</mosaic_0001>

<llo_original>
// kernel: tpu_custom_call.1
$region0: #{tpu_custom_call.1}
  #allocation0 [shape = 'u32[]', space=smem, size = 0x4, offset = 0x4, fixed_abs, tag = 'smem constant byte address 0x4 - core index']
  #allocation1 [shape = 'u32[144,128]{1,0:T(1,128)}', space=vmem, size = 0x12000, scoped, tag = 'internal scratch']
  %s0 = inlined_call_operand.hbm [shape: f32[8,16], index: 0, kind: input, shape index: {}]
  %s1 = inlined_call_operand.hbm [shape: f32[16,16], index: 1, kind: input, shape index: {}]
  %s2 = inlined_call_operand.vmem [shape: f32[1,16], index: 2, kind: input, shape index: {}]
  %s3 = inlined_call_operand.hbm [shape: f32[16,10], index: 3, kind: input, shape index: {}]
  %s4 = inlined_call_operand.vmem [shape: f32[1,10], index: 4, kind: input, shape index: {}]
  %s5 = inlined_call_operand.hbm [shape: f32[8,10], index: 5, kind: output, shape index: {}]
  %s6 = sld [smem:[#allocation0]]
  $region42: #{tpu_custom_call.1} parent=0
    _
  %s8 = ssub.s32 1, %s6
  %s9 = scalar_select 0, %s8, %s6
  $region1: #{tpu_custom_call.1} parent=0
    #allocation2 [shape = 'u8[4096]{0}', space=vmem, size = 0x1000, scoped, tag = 'input window, operand 0, single buffered']
    #allocation3 [shape = 's32[1]{0}', space=sflag, size = 0x4, scoped, tag = 'scoped memory for tpu_custom_call.1']
    #allocation4 [shape = 's32[1]{0}', space=sflag, size = 0x4, scoped, tag = 'scoped memory for tpu_custom_call.1']
    #allocation5 [shape = 'u8[8192]{0}', space=vmem, size = 0x2000, scoped, tag = 'input window, operand 1, single buffered']
    #allocation6 [shape = 's32[1]{0}', space=sflag, size = 0x4, scoped, tag = 'scoped memory for tpu_custom_call.1']
    #allocation7 [shape = 'u8[8192]{0}', space=vmem, size = 0x2000, scoped, tag = 'input window, operand 3, single buffered']
    #allocation8 [shape = 'u8[4096]{0}', space=vmem, size = 0x1000, scoped, tag = 'output window, operand 0, single buffered']
    %10 = vsyncpa [#allocation3], 0
    %11 = vsyncpa [#allocation6], 0
    %12 = vsyncpa [#allocation4], 0
    // Predicated region
    $region2: #{tpu_custom_call.1} parent=1 // pred_check
      _
    $region3: #{tpu_custom_call.1} parent=1 // pred_check_branch
      %14 = sbr.rel (0) target = $region5
    $region4: #{tpu_custom_call.1} parent=1 // pred_region
      %s16 = ssub.s32 128, 128
      %17 = vsyncadd [#allocation3], %s16
      %s19 = sshll.u32 [#allocation2], 4
      %s20 = int_to_ptr.vmem [resolvable:$true] %s19
      %22 = dma.hbm_to_vmem [thread:$0]  %s0, 128, %s20, [#allocation3]
    $region5: #{tpu_custom_call.1} parent=1 // pred_fallthru
      _
    // Predicated region
    $region6: #{tpu_custom_call.1} parent=1 // pred_check
      _
    $region7: #{tpu_custom_call.1} parent=1 // pred_check_branch
      %24 = sbr.rel (0) target = $region9
    $region8: #{tpu_custom_call.1} parent=1 // pred_region
      %s26 = ssub.s32 256, 256
      %27 = vsyncadd [#allocation6], %s26
      %s28 = sshll.u32 [#allocation5], 4
      %s29 = int_to_ptr.vmem [resolvable:$true] %s28
      %34 = dma.hbm_to_vmem [thread:$0]  %s1, 256, %s29, [#allocation6], 128, 128, 8
    $region9: #{tpu_custom_call.1} parent=1 // pred_fallthru
      _
    // Predicated region
    $region10: #{tpu_custom_call.1} parent=1 // pred_check
      _
    $region11: #{tpu_custom_call.1} parent=1 // pred_check_branch
      %36 = sbr.rel (0) target = $region13
    $region12: #{tpu_custom_call.1} parent=1 // pred_region
      _
    $region13: #{tpu_custom_call.1} parent=1 // pred_fallthru
      _
    // Predicated region
    $region14: #{tpu_custom_call.1} parent=1 // pred_check
      _
    $region15: #{tpu_custom_call.1} parent=1 // pred_check_branch
      %38 = sbr.rel (0) target = $region17
    $region16: #{tpu_custom_call.1} parent=1 // pred_region
      %s40 = ssub.s32 256, 256
      %41 = vsyncadd [#allocation6], %s40
      %s42 = sshll.u32 [#allocation7], 4
      %s43 = int_to_ptr.vmem [resolvable:$true] %s42
      %48 = dma.hbm_to_vmem [thread:$0]  %s3, 256, %s43, [#allocation6], 128, 128, 8
    $region17: #{tpu_custom_call.1} parent=1 // pred_fallthru
      _
    // Predicated region
    $region18: #{tpu_custom_call.1} parent=1 // pred_check
      _
    $region19: #{tpu_custom_call.1} parent=1 // pred_check_branch
      %50 = sbr.rel (0) target = $region21
    $region20: #{tpu_custom_call.1} parent=1 // pred_region
      _
    $region21: #{tpu_custom_call.1} parent=1 // pred_fallthru
      _
    // Predicated region
    $region22: #{tpu_custom_call.1} parent=1 // pred_check
      _
    $region23: #{tpu_custom_call.1} parent=1 // pred_check_branch
      %52 = sbr.rel (0) target = $region25
    $region24: #{tpu_custom_call.1} parent=1 // pred_region
      %53 = dma.done [#allocation3], 128
    $region25: #{tpu_custom_call.1} parent=1 // pred_fallthru
      _
    // Predicated region
    $region26: #{tpu_custom_call.1} parent=1 // pred_check
      _
    $region27: #{tpu_custom_call.1} parent=1 // pred_check_branch
      %55 = sbr.rel (0) target = $region29
    $region28: #{tpu_custom_call.1} parent=1 // pred_region
      %56 = dma.done [#allocation6], 256
    $region29: #{tpu_custom_call.1} parent=1 // pred_fallthru
      _
    // Predicated region
    $region30: #{tpu_custom_call.1} parent=1 // pred_check
      _
    $region31: #{tpu_custom_call.1} parent=1 // pred_check_branch
      %58 = sbr.rel (0) target = $region33
    $region32: #{tpu_custom_call.1} parent=1 // pred_region
      %59 = dma.done [#allocation6], 256
    $region33: #{tpu_custom_call.1} parent=1 // pred_fallthru
      _
    %v60 = vld [vmem:[#allocation2] sm:$0xff]
    %v61 = vld [vmem:[#allocation5] sm:$0xff]
    %v62 = vld [vmem:[#allocation5 + $0x8] sm:$0xff]
    %v63 = vld [vmem:[%s2] sm:$0x1]
    %v65 = vlaneseq
    %v66 = vshrl.u32 %v65, 7
    %v67 = vsub.s32 0, %v66
    %v68 = vrot.slane %v63, %v67
    %vm70 = vcmask 130048
    %v72 = vsel %vm70, %v60, 0
    %74 = vmatprep.subr.mxu0 0.0
    %75 = vmatpush1.msra.mxu0 0.0
    %76 = vmatprep.subr.mxu0 0.0
    %77 = vmatpush1.msra.mxu0 0.0
    %78 = vmatprep.subr.mxu0 0.0
    %79 = vmatpush1.msra.mxu0 0.0
    %80 = vmatprep.subr.mxu0 0.0
    %81 = vmatpush1.msra.mxu0 0.0
    %82 = vmatprep.subr.mxu0 0.0
    %83 = vmatpush1.msra.mxu0 0.0
    %84 = vmatprep.subr.mxu0 0.0
    %85 = vmatpush1.msra.mxu0 0.0
    %86 = vmatprep.subr.mxu0 0.0
    %87 = vmatpush1.msra.mxu0 0.0
    %88 = vmatprep.subr.mxu0 0.0
    %89 = vmatpush1.msra.mxu0 0.0
    %90 = vmatprep.subr.mxu0 0.0
    %91 = vmatpush1.msra.mxu0 0.0
    %92 = vmatprep.subr.mxu0 0.0
    %93 = vmatpush1.msra.mxu0 0.0
    %94 = vmatprep.subr.mxu0 0.0
    %95 = vmatpush1.msra.mxu0 0.0
    %96 = vmatprep.subr.mxu0 0.0
    %97 = vmatpush1.msra.mxu0 0.0
    %98 = vmatprep.subr.mxu0 0.0
    %99 = vmatpush1.msra.mxu0 0.0
    %100 = vmatprep.subr.mxu0 0.0
    %101 = vmatpush1.msra.mxu0 0.0
    %102 = vmatprep.subr.mxu0 0.0
    %103 = vmatpush1.msra.mxu0 %v62
    %104 = vmatprep.subr.mxu0 0.0
    %105 = vmatpush1.msra.mxu0 %v61
    %106 = vmatprep.subr.mxu0 0.0
    %107 = vmatpush2.msra.mxu0 0.0
    %108 = vmatprep.subr.mxu0 0.0
    %109 = vmatpush2.msra.mxu0 0.0
    %110 = vmatprep.subr.mxu0 0.0
    %111 = vmatpush2.msra.mxu0 0.0
    %112 = vmatprep.subr.mxu0 0.0
    %113 = vmatpush2.msra.mxu0 0.0
    %114 = vmatprep.subr.mxu0 0.0
    %115 = vmatpush2.msra.mxu0 0.0
    %116 = vmatprep.subr.mxu0 0.0
    %117 = vmatpush2.msra.mxu0 0.0
    %118 = vmatprep.subr.mxu0 0.0
    %119 = vmatpush2.msra.mxu0 0.0
    %120 = vmatprep.subr.mxu0 0.0
    %121 = vmatpush2.msra.mxu0 0.0
    %122 = vmatprep.subr.mxu0 0.0
    %123 = vmatpush2.msra.mxu0 0.0
    %124 = vmatprep.subr.mxu0 0.0
    %125 = vmatpush2.msra.mxu0 0.0
    %126 = vmatprep.subr.mxu0 0.0
    %127 = vmatpush2.msra.mxu0 0.0
    %128 = vmatprep.subr.mxu0 0.0
    %129 = vmatpush2.msra.mxu0 0.0
    %130 = vmatprep.subr.mxu0 0.0
    %131 = vmatpush2.msra.mxu0 0.0
    %132 = vmatprep.subr.mxu0 0.0
    %133 = vmatpush2.msra.mxu0 0.0
    %134 = vmatprep.subr.mxu0 0.0
    %135 = vmatpush2.msra.mxu0 0.0
    %136 = vmatprep.subr.mxu0 0.0
    %137 = vmatpush2.msra.mxu0 0.0
    %138 = vmatprep.mubr.f32.mxu0 0.0
    %139 = vmatmul.mubr.f32.gmra.mxu0 %v72
    %v140 = vpop.f32.mrf.mxu0
    %v141 = vadd.f32 %v68, %v140
    %v142 = vpop.f32.mrf.mxu0
    %143 = vdwg.mxu0
    %v144 = vmul.f32 %v141, 0.5
    %v145 = vtanh.pop %v144
    %v146 = vadd.f32 %v145, 1.0
    %v147 = vmul.f32 %v146, 0.5
    %v148 = vld [vmem:[#allocation7] sm:$0xff]
    %v149 = vld [vmem:[#allocation7 + $0x8] sm:$0xff]
    %v150 = vld [vmem:[%s4] sm:$0x1]
    %v152 = vlaneseq
    %v153 = vshrl.u32 %v152, 7
    %v154 = vsub.s32 0, %v153
    %v155 = vrot.slane %v150, %v154
    %v158 = vsel %vm70, %v147, 0
    %160 = vmatprep.subr.mxu0 0.0
    %161 = vmatpush1.msra.mxu0 0.0
    %162 = vmatprep.subr.mxu0 0.0
    %163 = vmatpush1.msra.mxu0 0.0
    %164 = vmatprep.subr.mxu0 0.0
    %165 = vmatpush1.msra.mxu0 0.0
    %166 = vmatprep.subr.mxu0 0.0
    %167 = vmatpush1.msra.mxu0 0.0
    %168 = vmatprep.subr.mxu0 0.0
    %169 = vmatpush1.msra.mxu0 0.0
    %170 = vmatprep.subr.mxu0 0.0
    %171 = vmatpush1.msra.mxu0 0.0
    %172 = vmatprep.subr.mxu0 0.0
    %173 = vmatpush1.msra.mxu0 0.0
    %174 = vmatprep.subr.mxu0 0.0
    %175 = vmatpush1.msra.mxu0 0.0
    %176 = vmatprep.subr.mxu0 0.0
    %177 = vmatpush1.msra.mxu0 0.0
    %178 = vmatprep.subr.mxu0 0.0
    %179 = vmatpush1.msra.mxu0 0.0
    %180 = vmatprep.subr.mxu0 0.0
    %181 = vmatpush1.msra.mxu0 0.0
    %182 = vmatprep.subr.mxu0 0.0
    %183 = vmatpush1.msra.mxu0 0.0
    %184 = vmatprep.subr.mxu0 0.0
    %185 = vmatpush1.msra.mxu0 0.0
    %186 = vmatprep.subr.mxu0 0.0
    %187 = vmatpush1.msra.mxu0 0.0
    %188 = vmatprep.subr.mxu0 0.0
    %189 = vmatpush1.msra.mxu0 %v149
    %190 = vmatprep.subr.mxu0 0.0
    %191 = vmatpush1.msra.mxu0 %v148
    %192 = vmatprep.subr.mxu0 0.0
    %193 = vmatpush2.msra.mxu0 0.0
    %194 = vmatprep.subr.mxu0 0.0
    %195 = vmatpush2.msra.mxu0 0.0
    %196 = vmatprep.subr.mxu0 0.0
    %197 = vmatpush2.msra.mxu0 0.0
    %198 = vmatprep.subr.mxu0 0.0
    %199 = vmatpush2.msra.mxu0 0.0
    %200 = vmatprep.subr.mxu0 0.0
    %201 = vmatpush2.msra.mxu0 0.0
    %202 = vmatprep.subr.mxu0 0.0
    %203 = vmatpush2.msra.mxu0 0.0
    %204 = vmatprep.subr.mxu0 0.0
    %205 = vmatpush2.msra.mxu0 0.0
    %206 = vmatprep.subr.mxu0 0.0
    %207 = vmatpush2.msra.mxu0 0.0
    %208 = vmatprep.subr.mxu0 0.0
    %209 = vmatpush2.msra.mxu0 0.0
    %210 = vmatprep.subr.mxu0 0.0
    %211 = vmatpush2.msra.mxu0 0.0
    %212 = vmatprep.subr.mxu0 0.0
    %213 = vmatpush2.msra.mxu0 0.0
    %214 = vmatprep.subr.mxu0 0.0
    %215 = vmatpush2.msra.mxu0 0.0
    %216 = vmatprep.subr.mxu0 0.0
    %217 = vmatpush2.msra.mxu0 0.0
    %218 = vmatprep.subr.mxu0 0.0
    %219 = vmatpush2.msra.mxu0 0.0
    %220 = vmatprep.subr.mxu0 0.0
    %221 = vmatpush2.msra.mxu0 0.0
    %222 = vmatprep.subr.mxu0 0.0
    %223 = vmatpush2.msra.mxu0 0.0
    %224 = vmatprep.mubr.f32.mxu0 0.0
    %225 = vmatmul.mubr.f32.gmra.mxu0 %v158
    %v226 = vpop.f32.mrf.mxu0
    %v227 = vadd.f32 %v155, %v226
    %v228 = vpop.f32.mrf.mxu0
    %229 = vdwg.mxu0
    %vm230 = vcmask 80896
    %231 = vst.msk [vmem:[#allocation8] sm:$0xff] %vm230, %v227
    // Predicated region
    $region34: #{tpu_custom_call.1} parent=1 // pred_check
      _
    $region35: #{tpu_custom_call.1} parent=1 // pred_check_branch
      %233 = sbr.rel (0) target = $region37
    $region36: #{tpu_custom_call.1} parent=1 // pred_region
      %s235 = ssub.s32 128, 128
      %236 = vsyncadd [#allocation4], %s235
      %s238 = sshll.u32 [#allocation8], 4
      %s239 = int_to_ptr.vmem [resolvable:$true] %s238
      %241 = dma.vmem_to_hbm [thread:$0]  %s239, 128, %s5, [#allocation4]
    $region37: #{tpu_custom_call.1} parent=1 // pred_fallthru
      _
    // Predicated region
    $region38: #{tpu_custom_call.1} parent=1 // pred_check
      _
    $region39: #{tpu_custom_call.1} parent=1 // pred_check_branch
      %243 = sbr.rel (0) target = $region41
    $region40: #{tpu_custom_call.1} parent=1 // pred_region
      %244 = dma.done [#allocation4], 128
    $region41: #{tpu_custom_call.1} parent=1 // pred_fallthru
      _
    %245 = vsyncpa [#allocation3], 1
    %246 = vsyncpa [#allocation6], 1
    %247 = vsyncpa [#allocation4], 1

</llo_original>
